<compile_context>
chip_gen: v7x
topology: tpu7x:2x2x1
jax: 0.10.0
libtpu: 0.0.40
codegen_flags: <defaults>
</compile_context>

<pallas_src>
import functools

import jax
import jax.numpy as jnp
from jax.experimental import pallas as pl
from jax.experimental.pallas import tpu as pltpu


def _fused_mlp_kernel(x_ref, w_ref, b_ref, o_ref, *, n_layers):
    """Fused TestNetwork forward: rep = rep @ W_t[l] + b[l]; ReLU after even-indexed l.

    grid = (cdiv(M, tm),): one batch-row tile per grid step. Weights/biases use a constant
    index_map (single-buffered) so they are DMA'd into VMEM once and stay resident.
    K == model_dim fits a single tile -> no reduction axis, no accumulator scratch.
    """
    rep = x_ref[...].astype(jnp.float32)
    for l in range(n_layers):  # static Python loop -> fully unrolled, scheduler-visible
        y = jnp.dot(
            rep.astype(jnp.bfloat16),            # MXU is bf16-native on v5e/v6e/v7x
            w_ref[l],                            # (K, N) bf16, resident in VMEM
            preferred_element_type=jnp.float32,  # f32 accumulation
        )
        rep = y + b_ref[l]                       # bias-add in f32 (v5e VPU has no bf16)
        if l % 2 == 0:                           # ReLU after even-indexed layers (matches torch)
            rep = jnp.maximum(rep, 0.0)
    o_ref[...] = rep.astype(o_ref.dtype)


def _round_up(x, m):
    return ((x + m - 1) // m) * m


def _vmem_cap_bytes():
    """Per-generation VMEM request ceiling (leave headroom for Mosaic internal scratch)."""
    try:
        kind = jax.devices()[0].device_kind.lower()
    except Exception:  # pragma: no cover - defensive; fall through to conservative cap
        kind = ""
    if "v7" in kind:
        return 56 << 20   # v7x: 64 MiB physical per TC -> leave ~8 MiB headroom
    return 100 << 20      # v5e / v6e: 128 MiB physical (default scoped limit is much lower)


def fused_mlp_pallas(x, w_t_stack, b_stack, *, tm_max=128):
    """Run the whole n_layers MLP in ONE Pallas kernel.

    x:         (M, K) float32
    w_t_stack: (L, K, N) bfloat16  -- already transposed vs. torch Linear.weight
    b_stack:   (L, 1, N) float32
    """
    M, K = x.shape
    L, K2, N = w_t_stack.shape
    assert K == K2 == N, "TestNetwork layers are square (model_dim x model_dim)"
    assert b_stack.shape == (L, 1, N)

    # Batch tile: multiple of 8 sublanes (f32 activation tiles), capped at 128 to bound vreg
    # pressure from the f32 activation held live across the unrolled layer loop.
    tm = min(tm_max, _round_up(M, 8))
    grid_m = pl.cdiv(M, tm)  # ragged last block: overhang rows never written back

    # VMEM budget: single-buffered resident weights/biases + double-buffered x / out tiles.
    w_bytes = L * K * N * jnp.dtype(w_t_stack.dtype).itemsize
    b_bytes = L * 1 * N * jnp.dtype(b_stack.dtype).itemsize
    act_bytes = 2 * tm * K * jnp.dtype(x.dtype).itemsize + 2 * tm * N * jnp.dtype(x.dtype).itemsize
    vmem_need = w_bytes + b_bytes + act_bytes
    vmem_cap = _vmem_cap_bytes()
    vmem_limit = int(min(max(vmem_need + (8 << 20), 32 << 20), vmem_cap))
    # TODO(synk): when resident bf16 weights no longer fit the per-generation VMEM cap
    # (first on v7x), keep the single fused pallas_call but stream per-layer weights with
    # pltpu.emit_pipeline (Buffered(2-3) weight window) while holding rep in VMEM scratch,
    # instead of falling back to per-layer pallas_calls.
    assert vmem_need <= vmem_cap, "resident-weight design exceeds VMEM; needs weight streaming"

    kernel = functools.partial(_fused_mlp_kernel, n_layers=L)

    cost = pl.CostEstimate(
        flops=2 * M * K * N * L + M * N * L,
        transcendentals=0,
        bytes_accessed=(M * K * 4 + w_bytes + b_bytes + M * N * 4),
    )

    out = pl.pallas_call(
        kernel,
        out_shape=jax.ShapeDtypeStruct((M, N), x.dtype),
        grid_spec=pltpu.PrefetchScalarGridSpec(
            num_scalar_prefetch=0,
            grid=(grid_m,),
            in_specs=[
                pl.BlockSpec((tm, K), lambda i: (i, 0)),  # activation tile (pipelined)
                pl.BlockSpec(                              # all weights, resident, single-buffered
                    (L, K, N), lambda i: (0, 0, 0), pipeline_mode=pl.Buffered(1)
                ),
                pl.BlockSpec(                              # all biases, resident, single-buffered
                    (L, 1, N), lambda i: (0, 0, 0), pipeline_mode=pl.Buffered(1)
                ),
            ],
            out_specs=pl.BlockSpec((tm, N), lambda i: (i, 0)),
        ),
        compiler_params=pltpu.CompilerParams(
            dimension_semantics=("parallel",),  # shards batch tiles across v7x's two TCs
            vmem_limit_bytes=vmem_limit,
        ),
        cost_estimate=cost,
    )(x, w_t_stack, b_stack)

    return out


def init_params(key, model_dim, n_layers, params_dtype=jnp.float32):
    """Deterministic nn.Linear-style init: U(-1/sqrt(in), 1/sqrt(in)) for W and b.

    Weights are transposed ONCE here, stacked (L, in, out) and stored in bf16 (MXU-native);
    biases stacked (L, 1, out) in f32 (elementwise math stays f32).
    """
    assert n_layers % 2 == 0, "TestNetwork requires an even number of layers"
    bound = 1.0 / (model_dim ** 0.5)
    w_ts, bs = [], []
    for _ in range(n_layers):
        kw, kb, key = jax.random.split(key, 3)
        w = jax.random.uniform(
            kw, (model_dim, model_dim), dtype=params_dtype, minval=-bound, maxval=bound
        )  # torch layout (out, in)
        b = jax.random.uniform(
            kb, (model_dim,), dtype=params_dtype, minval=-bound, maxval=bound
        )
        w_ts.append(w.T)                      # pre-transpose once, not per forward
        bs.append(b.reshape(1, model_dim))
    w_t_stack = jnp.stack(w_ts).astype(jnp.bfloat16)
    b_stack = jnp.stack(bs).astype(jnp.float32)
    return w_t_stack, b_stack


@jax.jit
def test_network_forward(x, w_t_stack, b_stack):
    """Replicates TestNetwork.forward (non-distributed path) as one fused Pallas kernel."""
    return fused_mlp_pallas(x, w_t_stack, b_stack)


if __name__ == "__main__":
    model_dim = 128
    n_layers = 4
    batch = 8

    key = jax.random.PRNGKey(0)
    kx, kp = jax.random.split(key)
    x = jax.random.normal(kx, (batch, model_dim), dtype=jnp.float32)
    w_t_stack, b_stack = init_params(kp, model_dim, n_layers)

    out = test_network_forward(x, w_t_stack, b_stack)
    jax.block_until_ready(out)

    # Pure-JAX reference with matching precision (bf16 matmul operands, f32 accumulation,
    # f32 bias-add / ReLU) so the tolerance can stay tight.
    ref = x
    for i in range(n_layers):
        ref = (
            jnp.dot(
                ref.astype(jnp.bfloat16), w_t_stack[i], preferred_element_type=jnp.float32
            )
            + b_stack[i, 0]
        )
        if i % 2 == 0:
            ref = jnp.maximum(ref, 0.0)
    assert jnp.allclose(out, ref, atol=2e-3, rtol=2e-3), "mismatch vs reference"

    print("KERNEL_OK")
</pallas_src>

<mosaic_0001>
module attributes {stable_mosaic.version = 11 : i64} {
  func.func @_fused_mlp_kernel(%arg0: i32, %arg1: memref<8x128xf32, #tpu.memory_space<vmem>>, %arg2: memref<4x128x128xbf16, #tpu.memory_space<vmem>>, %arg3: memref<4x1x128xf32, #tpu.memory_space<vmem>>, %arg4: memref<8x128xf32, #tpu.memory_space<vmem>>) attributes {dimension_semantics = [#tpu.dimension_semantics<parallel>], iteration_bounds = array<i64: 1>, scalar_prefetch = 0 : i64, scratch_operands = 0 : i64, tpu.core_type = #tpu.core_type<tc>, window_params = [{transform_indices = @transform_0, window_bounds = array<i64: 8, 128>}, {pipeline_mode = #tpu.pipeline_mode<synchronous>, transform_indices = @transform_1, window_bounds = array<i64: 4, 128, 128>}, {pipeline_mode = #tpu.pipeline_mode<synchronous>, transform_indices = @transform_2, window_bounds = array<i64: 4, 1, 128>}, {transform_indices = @transform_3, window_bounds = array<i64: 8, 128>}]} {
    %c0 = arith.constant 0 : index
    %c0_0 = arith.constant 0 : index
    %0 = vector.load %arg1[%c0, %c0_0] : memref<8x128xf32, #tpu.memory_space<vmem>>, vector<8x128xf32>
    %1 = arith.truncf %0 : vector<8x128xf32> to vector<8x128xbf16>
    %c0_1 = arith.constant 0 : index
    %c0_2 = arith.constant 0 : index
    %c0_3 = arith.constant 0 : index
    %2 = vector.load %arg2[%c0_1, %c0_2, %c0_3] : memref<4x128x128xbf16, #tpu.memory_space<vmem>>, vector<1x128x128xbf16>
    %3 = vector.shape_cast %2 : vector<1x128x128xbf16> to vector<128x128xbf16>
    %cst = arith.constant dense<0.000000e+00> : vector<8x128xf32>
    %4 = tpu.matmul %1, %3, %cst {dimension_numbers = #tpu.dot_dimension_numbers<[1], [0], [0], [1], [0, 0, 1, 1], [], []>} : vector<8x128xbf16>, vector<128x128xbf16>, vector<8x128xf32> -> vector<8x128xf32>
    %c0_4 = arith.constant 0 : index
    %c0_5 = arith.constant 0 : index
    %c0_6 = arith.constant 0 : index
    %5 = vector.load %arg3[%c0_4, %c0_5, %c0_6] : memref<4x1x128xf32, #tpu.memory_space<vmem>>, vector<1x1x128xf32>
    %6 = vector.shape_cast %5 : vector<1x1x128xf32> to vector<1x128xf32>
    %7 = vector.broadcast %6 : vector<1x128xf32> to vector<8x128xf32>
    %8 = arith.addf %4, %7 : vector<8x128xf32>
    %cst_7 = arith.constant 0.000000e+00 : f32
    %9 = vector.broadcast %cst_7 : f32 to vector<8x128xf32>
    %10 = arith.maximumf %8, %9 : vector<8x128xf32>
    %11 = arith.truncf %10 : vector<8x128xf32> to vector<8x128xbf16>
    %c1 = arith.constant 1 : index
    %c0_8 = arith.constant 0 : index
    %c0_9 = arith.constant 0 : index
    %12 = vector.load %arg2[%c1, %c0_8, %c0_9] : memref<4x128x128xbf16, #tpu.memory_space<vmem>>, vector<1x128x128xbf16>
    %13 = vector.shape_cast %12 : vector<1x128x128xbf16> to vector<128x128xbf16>
    %cst_10 = arith.constant dense<0.000000e+00> : vector<8x128xf32>
    %14 = tpu.matmul %11, %13, %cst_10 {dimension_numbers = #tpu.dot_dimension_numbers<[1], [0], [0], [1], [0, 0, 1, 1], [], []>} : vector<8x128xbf16>, vector<128x128xbf16>, vector<8x128xf32> -> vector<8x128xf32>
    %c1_11 = arith.constant 1 : index
    %c0_12 = arith.constant 0 : index
    %c0_13 = arith.constant 0 : index
    %15 = vector.load %arg3[%c1_11, %c0_12, %c0_13] : memref<4x1x128xf32, #tpu.memory_space<vmem>>, vector<1x1x128xf32>
    %16 = vector.shape_cast %15 : vector<1x1x128xf32> to vector<1x128xf32>
    %17 = vector.broadcast %16 : vector<1x128xf32> to vector<8x128xf32>
    %18 = arith.addf %14, %17 : vector<8x128xf32>
    %19 = arith.truncf %18 : vector<8x128xf32> to vector<8x128xbf16>
    %c2 = arith.constant 2 : index
    %c0_14 = arith.constant 0 : index
    %c0_15 = arith.constant 0 : index
    %20 = vector.load %arg2[%c2, %c0_14, %c0_15] : memref<4x128x128xbf16, #tpu.memory_space<vmem>>, vector<1x128x128xbf16>
    %21 = vector.shape_cast %20 : vector<1x128x128xbf16> to vector<128x128xbf16>
    %cst_16 = arith.constant dense<0.000000e+00> : vector<8x128xf32>
    %22 = tpu.matmul %19, %21, %cst_16 {dimension_numbers = #tpu.dot_dimension_numbers<[1], [0], [0], [1], [0, 0, 1, 1], [], []>} : vector<8x128xbf16>, vector<128x128xbf16>, vector<8x128xf32> -> vector<8x128xf32>
    %c2_17 = arith.constant 2 : index
    %c0_18 = arith.constant 0 : index
    %c0_19 = arith.constant 0 : index
    %23 = vector.load %arg3[%c2_17, %c0_18, %c0_19] : memref<4x1x128xf32, #tpu.memory_space<vmem>>, vector<1x1x128xf32>
    %24 = vector.shape_cast %23 : vector<1x1x128xf32> to vector<1x128xf32>
    %25 = vector.broadcast %24 : vector<1x128xf32> to vector<8x128xf32>
    %26 = arith.addf %22, %25 : vector<8x128xf32>
    %cst_20 = arith.constant 0.000000e+00 : f32
    %27 = vector.broadcast %cst_20 : f32 to vector<8x128xf32>
    %28 = arith.maximumf %26, %27 : vector<8x128xf32>
    %29 = arith.truncf %28 : vector<8x128xf32> to vector<8x128xbf16>
    %c3 = arith.constant 3 : index
    %c0_21 = arith.constant 0 : index
    %c0_22 = arith.constant 0 : index
    %30 = vector.load %arg2[%c3, %c0_21, %c0_22] : memref<4x128x128xbf16, #tpu.memory_space<vmem>>, vector<1x128x128xbf16>
    %31 = vector.shape_cast %30 : vector<1x128x128xbf16> to vector<128x128xbf16>
    %cst_23 = arith.constant dense<0.000000e+00> : vector<8x128xf32>
    %32 = tpu.matmul %29, %31, %cst_23 {dimension_numbers = #tpu.dot_dimension_numbers<[1], [0], [0], [1], [0, 0, 1, 1], [], []>} : vector<8x128xbf16>, vector<128x128xbf16>, vector<8x128xf32> -> vector<8x128xf32>
    %c3_24 = arith.constant 3 : index
    %c0_25 = arith.constant 0 : index
    %c0_26 = arith.constant 0 : index
    %33 = vector.load %arg3[%c3_24, %c0_25, %c0_26] : memref<4x1x128xf32, #tpu.memory_space<vmem>>, vector<1x1x128xf32>
    %34 = vector.shape_cast %33 : vector<1x1x128xf32> to vector<1x128xf32>
    %35 = vector.broadcast %34 : vector<1x128xf32> to vector<8x128xf32>
    %36 = arith.addf %32, %35 : vector<8x128xf32>
    %c0_27 = arith.constant 0 : index
    %c0_28 = arith.constant 0 : index
    %37 = vector.load %arg4[%c0_27, %c0_28] : memref<8x128xf32, #tpu.memory_space<vmem>>, vector<8x128xf32>
    tpu.vector_store %arg4[%c0_27, %c0_28], %36 {strides = array<i32>} : memref<8x128xf32, #tpu.memory_space<vmem>>, vector<8x128xf32>,
    return
  }
  func.func @transform_0(%arg0: i32) -> (i32, i32) {
    %c0_i32 = arith.constant 0 : i32
    %c0_i32_0 = arith.constant 0 : i32
    return %arg0, %c0_i32 : i32, i32
  }
  func.func @transform_1(%arg0: i32) -> (i32, i32, i32) {
    %c0_i32 = arith.constant 0 : i32
    %c0_i32_0 = arith.constant 0 : i32
    %c0_i32_1 = arith.constant 0 : i32
    %c0_i32_2 = arith.constant 0 : i32
    return %c0_i32, %c0_i32_0, %c0_i32_1 : i32, i32, i32
  }
  func.func @transform_2(%arg0: i32) -> (i32, i32, i32) {
    %c0_i32 = arith.constant 0 : i32
    %c0_i32_0 = arith.constant 0 : i32
    %c0_i32_1 = arith.constant 0 : i32
    %c0_i32_2 = arith.constant 0 : i32
    return %c0_i32, %c0_i32_0, %c0_i32_1 : i32, i32, i32
  }
  func.func @transform_3(%arg0: i32) -> (i32, i32) {
    %c0_i32 = arith.constant 0 : i32
    %c0_i32_0 = arith.constant 0 : i32
    return %arg0, %c0_i32 : i32, i32
  }
}

</mosaic_0001>

<llo_original>
// kernel: test_network_forward.1
$region0: #{test_network_forward.1}
  #allocation0 [shape = 'u32[]', space=smem, size = 0x4, offset = 0x4, fixed_abs, tag = 'smem constant byte address 0x4 - core index']
  #allocation1 [shape = 'u32[144,128]{1,0:T(1,128)}', space=vmem, size = 0x12000, scoped, tag = 'internal scratch']
  %s0 = inlined_call_operand.hbm [shape: f32[8,128], index: 0, kind: input, shape index: {}]
  %s1 = inlined_call_operand.hbm [shape: bf16[4,128,128], index: 1, kind: input, shape index: {}]
  %s2 = inlined_call_operand.vmem [shape: f32[4,1,128], index: 2, kind: input, shape index: {}]
  %s3 = inlined_call_operand.hbm [shape: f32[8,128], index: 3, kind: output, shape index: {}]
  %s4 = sld [smem:[#allocation0]]
  $region30: #{test_network_forward.1} parent=0
    _
  %s6 = ssub.s32 1, %s4
  %s7 = scalar_select 0, %s6, %s4
  $region1: #{test_network_forward.1} parent=0
    #allocation2 [shape = 'u8[4096]{0}', space=vmem, size = 0x1000, scoped, tag = 'input window, operand 0, single buffered']
    #allocation3 [shape = 's32[1]{0}', space=sflag, size = 0x4, scoped, tag = 'scoped memory for test_network_forward.1']
    #allocation4 [shape = 's32[1]{0}', space=sflag, size = 0x4, scoped, tag = 'scoped memory for test_network_forward.1']
    #allocation5 [shape = 'u8[131072]{0}', space=vmem, size = 0x20000, scoped, tag = 'input window, operand 1, single buffered']
    #allocation6 [shape = 's32[1]{0}', space=sflag, size = 0x4, scoped, tag = 'scoped memory for test_network_forward.1']
    #allocation7 [shape = 'u8[4096]{0}', space=vmem, size = 0x1000, scoped, tag = 'output window, operand 0, single buffered']
    %8 = vsyncpa [#allocation3], 0
    %9 = vsyncpa [#allocation6], 0
    %10 = vsyncpa [#allocation4], 0
    // Predicated region
    $region2: #{test_network_forward.1} parent=1 // pred_check
      _
    $region3: #{test_network_forward.1} parent=1 // pred_check_branch
      %12 = sbr.rel (0) target = $region5
    $region4: #{test_network_forward.1} parent=1 // pred_region
      %s14 = ssub.s32 128, 128
      %15 = vsyncadd [#allocation3], %s14
      %s17 = sshll.u32 [#allocation2], 4
      %s18 = int_to_ptr.vmem [resolvable:$true] %s17
      %20 = dma.hbm_to_vmem [thread:$0]  %s0, 128, %s18, [#allocation3]
    $region5: #{test_network_forward.1} parent=1 // pred_fallthru
      _
    // Predicated region
    $region6: #{test_network_forward.1} parent=1 // pred_check
      _
    $region7: #{test_network_forward.1} parent=1 // pred_check_branch
      %22 = sbr.rel (0) target = $region9
    $region8: #{test_network_forward.1} parent=1 // pred_region
      %s24 = ssub.s32 4096, 4096
      %25 = vsyncadd [#allocation6], %s24
      %s26 = sshll.u32 [#allocation5], 4
      %s27 = int_to_ptr.vmem [resolvable:$true] %s26
      %32 = dma.hbm_to_vmem [thread:$0]  %s1, 4096, %s27, [#allocation6], 64, 64, 4
    $region9: #{test_network_forward.1} parent=1 // pred_fallthru
      _
    // Predicated region
    $region10: #{test_network_forward.1} parent=1 // pred_check
      _
    $region11: #{test_network_forward.1} parent=1 // pred_check_branch
      %34 = sbr.rel (0) target = $region13
    $region12: #{test_network_forward.1} parent=1 // pred_region
      _
    $region13: #{test_network_forward.1} parent=1 // pred_fallthru
      _
    // Predicated region
    $region14: #{test_network_forward.1} parent=1 // pred_check
      _
    $region15: #{test_network_forward.1} parent=1 // pred_check_branch
      %36 = sbr.rel (0) target = $region17
    $region16: #{test_network_forward.1} parent=1 // pred_region
      %37 = dma.done [#allocation3], 128
    $region17: #{test_network_forward.1} parent=1 // pred_fallthru
      _
    // Predicated region
    $region18: #{test_network_forward.1} parent=1 // pred_check
      _
    $region19: #{test_network_forward.1} parent=1 // pred_check_branch
      %39 = sbr.rel (0) target = $region21
    $region20: #{test_network_forward.1} parent=1 // pred_region
      %40 = dma.done [#allocation6], 4096
    $region21: #{test_network_forward.1} parent=1 // pred_fallthru
      _
    %v42 = vld [vmem:[#allocation2] sm:$0xff]
    %v43 = vpack.c.bf16 %v42, %v42
    %v44 = vld [vmem:[#allocation5] sm:$0xf]
    %v45 = vld [vmem:[#allocation5 + $0x4] sm:$0xf]
    %v46 = vld [vmem:[#allocation5 + $0x8] sm:$0xf]
    %v47 = vld [vmem:[#allocation5 + $0xc] sm:$0xf]
    %v48 = vld [vmem:[#allocation5 + $0x10] sm:$0xf]
    %v49 = vld [vmem:[#allocation5 + $0x14] sm:$0xf]
    %v50 = vld [vmem:[#allocation5 + $0x18] sm:$0xf]
    %v51 = vld [vmem:[#allocation5 + $0x1c] sm:$0xf]
    %v52 = vld [vmem:[#allocation5 + $0x20] sm:$0xf]
    %v53 = vld [vmem:[#allocation5 + $0x24] sm:$0xf]
    %v54 = vld [vmem:[#allocation5 + $0x28] sm:$0xf]
    %v55 = vld [vmem:[#allocation5 + $0x2c] sm:$0xf]
    %v56 = vld [vmem:[#allocation5 + $0x30] sm:$0xf]
    %v57 = vld [vmem:[#allocation5 + $0x34] sm:$0xf]
    %v58 = vld [vmem:[#allocation5 + $0x38] sm:$0xf]
    %v59 = vld [vmem:[#allocation5 + $0x3c] sm:$0xf]
    %v60 = vld [vmem:[%s2] sm:$0x1]
    %v62 = vlaneseq
    %v63 = vshrl.u32 %v62, 7
    %v64 = vsub.s32 0, %v63
    %v65 = vrot.slane %v60, %v64
    %v83 = vunpack.c.l.b16 %v44
    %v84 = vunpack.c.l.b16 %v45
    %v85 = vunpack.c.l.b16 %v46
    %v86 = vunpack.c.l.b16 %v47
    %v87 = vunpack.c.l.b16 %v48
    %v88 = vunpack.c.l.b16 %v49
    %v89 = vunpack.c.l.b16 %v50
    %v90 = vunpack.c.l.b16 %v51
    %v91 = vunpack.c.l.b16 %v52
    %v92 = vunpack.c.l.b16 %v53
    %v93 = vunpack.c.l.b16 %v54
    %v94 = vunpack.c.l.b16 %v55
    %v95 = vunpack.c.l.b16 %v56
    %v96 = vunpack.c.l.b16 %v57
    %v97 = vunpack.c.l.b16 %v58
    %v98 = vunpack.c.l.b16 %v59
    %v99 = vpack.c.b16 %v84, %v83
    %v100 = vpack.c.b16 %v86, %v85
    %v101 = vpack.c.b16 %v88, %v87
    %v102 = vpack.c.b16 %v90, %v89
    %v103 = vpack.c.b16 %v92, %v91
    %v104 = vpack.c.b16 %v94, %v93
    %v105 = vpack.c.b16 %v96, %v95
    %v106 = vpack.c.b16 %v98, %v97
    %115 = vmatprep.subr.bf16.mxu0 0
    %116 = vmatpush1.bf16.msra.mxu0 %v99
    %117 = vmatprep.subr.bf16.mxu0 0
    %118 = vmatpush1.bf16.msra.mxu0 %v100
    %119 = vmatprep.subr.bf16.mxu0 0
    %120 = vmatpush1.bf16.msra.mxu0 %v101
    %121 = vmatprep.subr.bf16.mxu0 0
    %122 = vmatpush1.bf16.msra.mxu0 %v102
    %123 = vmatprep.subr.bf16.mxu0 0
    %124 = vmatpush1.bf16.msra.mxu0 %v103
    %125 = vmatprep.subr.bf16.mxu0 0
    %126 = vmatpush1.bf16.msra.mxu0 %v104
    %127 = vmatprep.subr.bf16.mxu0 0
    %128 = vmatpush1.bf16.msra.mxu0 %v105
    %129 = vmatprep.subr.bf16.mxu0 0
    %130 = vmatpush1.bf16.msra.mxu0 %v106
    %131 = vmatprep.subr.bf16.mxu0 0
    %132 = vmatpush1.bf16.msra.mxu0 0
    %133 = vmatprep.subr.bf16.mxu0 0
    %134 = vmatpush1.bf16.msra.mxu0 0
    %135 = vmatprep.subr.bf16.mxu0 0
    %136 = vmatpush1.bf16.msra.mxu0 0
    %137 = vmatprep.subr.bf16.mxu0 0
    %138 = vmatpush1.bf16.msra.mxu0 0
    %139 = vmatprep.subr.bf16.mxu0 0
    %140 = vmatpush1.bf16.msra.mxu0 0
    %141 = vmatprep.subr.bf16.mxu0 0
    %142 = vmatpush1.bf16.msra.mxu0 0
    %143 = vmatprep.subr.bf16.mxu0 0
    %144 = vmatpush1.bf16.msra.mxu0 0
    %145 = vmatprep.subr.bf16.mxu0 0
    %146 = vmatpush1.bf16.msra.mxu0 0
    %147 = vmatprep.mubr.bf16.mxu0 0
    %148 = vmatmul.mubr.bf16.gmra.mrb[0].mxu0 %v43
    %v149 = vpop.f32.mrb[0].mxu0
    %v150 = vadd.f32 %v65, %v149
    %v151 = vpop.f32.mrb[0].mxu0
    %v152 = vpop.f32.mrb[0].mxu0
    %v153 = vpop.f32.mrb[0].mxu0
    %154 = vdwg.mxu0
    %v155 = vmax.f32 %v150, 0.0
    %v156 = vpack.c.bf16 %v155, %v155
    %s157 = scalar_lea.vmem [#allocation5], 64
    %v158 = vld [vmem:[%s157] sm:$0xf]
    %v159 = vld [vmem:[%s157 + $0x4] sm:$0xf]
    %v160 = vld [vmem:[%s157 + $0x8] sm:$0xf]
    %v161 = vld [vmem:[%s157 + $0xc] sm:$0xf]
    %v162 = vld [vmem:[%s157 + $0x10] sm:$0xf]
    %v163 = vld [vmem:[%s157 + $0x14] sm:$0xf]
    %v164 = vld [vmem:[%s157 + $0x18] sm:$0xf]
    %v165 = vld [vmem:[%s157 + $0x1c] sm:$0xf]
    %v166 = vld [vmem:[%s157 + $0x20] sm:$0xf]
    %v167 = vld [vmem:[%s157 + $0x24] sm:$0xf]
    %v168 = vld [vmem:[%s157 + $0x28] sm:$0xf]
    %v169 = vld [vmem:[%s157 + $0x2c] sm:$0xf]
    %v170 = vld [vmem:[%s157 + $0x30] sm:$0xf]
    %v171 = vld [vmem:[%s157 + $0x34] sm:$0xf]
    %v172 = vld [vmem:[%s157 + $0x38] sm:$0xf]
    %v173 = vld [vmem:[%s157 + $0x3c] sm:$0xf]
    %s174 = scalar_lea.vmem %s2, 1
    %v175 = vld [vmem:[%s174] sm:$0x1]
    %v177 = vlaneseq
    %v178 = vshrl.u32 %v177, 7
    %v179 = vsub.s32 0, %v178
    %v180 = vrot.slane %v175, %v179
    %v198 = vunpack.c.l.b16 %v158
    %v199 = vunpack.c.l.b16 %v159
    %v200 = vunpack.c.l.b16 %v160
    %v201 = vunpack.c.l.b16 %v161
    %v202 = vunpack.c.l.b16 %v162
    %v203 = vunpack.c.l.b16 %v163
    %v204 = vunpack.c.l.b16 %v164
    %v205 = vunpack.c.l.b16 %v165
    %v206 = vunpack.c.l.b16 %v166
    %v207 = vunpack.c.l.b16 %v167
    %v208 = vunpack.c.l.b16 %v168
    %v209 = vunpack.c.l.b16 %v169
    %v210 = vunpack.c.l.b16 %v170
    %v211 = vunpack.c.l.b16 %v171
    %v212 = vunpack.c.l.b16 %v172
    %v213 = vunpack.c.l.b16 %v173
    %v214 = vpack.c.b16 %v199, %v198
    %v215 = vpack.c.b16 %v201, %v200
    %v216 = vpack.c.b16 %v203, %v202
    %v217 = vpack.c.b16 %v205, %v204
    %v218 = vpack.c.b16 %v207, %v206
    %v219 = vpack.c.b16 %v209, %v208
    %v220 = vpack.c.b16 %v211, %v210
    %v221 = vpack.c.b16 %v213, %v212
    %230 = vmatprep.subr.bf16.mxu0 0
    %231 = vmatpush1.bf16.msra.mxu0 %v214
    %232 = vmatprep.subr.bf16.mxu0 0
    %233 = vmatpush1.bf16.msra.mxu0 %v215
    %234 = vmatprep.subr.bf16.mxu0 0
    %235 = vmatpush1.bf16.msra.mxu0 %v216
    %236 = vmatprep.subr.bf16.mxu0 0
    %237 = vmatpush1.bf16.msra.mxu0 %v217
    %238 = vmatprep.subr.bf16.mxu0 0
    %239 = vmatpush1.bf16.msra.mxu0 %v218
    %240 = vmatprep.subr.bf16.mxu0 0
    %241 = vmatpush1.bf16.msra.mxu0 %v219
    %242 = vmatprep.subr.bf16.mxu0 0
    %243 = vmatpush1.bf16.msra.mxu0 %v220
    %244 = vmatprep.subr.bf16.mxu0 0
    %245 = vmatpush1.bf16.msra.mxu0 %v221
    %246 = vmatprep.subr.bf16.mxu0 0
    %247 = vmatpush1.bf16.msra.mxu0 0
    %248 = vmatprep.subr.bf16.mxu0 0
    %249 = vmatpush1.bf16.msra.mxu0 0
    %250 = vmatprep.subr.bf16.mxu0 0
    %251 = vmatpush1.bf16.msra.mxu0 0
    %252 = vmatprep.subr.bf16.mxu0 0
    %253 = vmatpush1.bf16.msra.mxu0 0
    %254 = vmatprep.subr.bf16.mxu0 0
    %255 = vmatpush1.bf16.msra.mxu0 0
    %256 = vmatprep.subr.bf16.mxu0 0
    %257 = vmatpush1.bf16.msra.mxu0 0
    %258 = vmatprep.subr.bf16.mxu0 0
    %259 = vmatpush1.bf16.msra.mxu0 0
    %260 = vmatprep.subr.bf16.mxu0 0
    %261 = vmatpush1.bf16.msra.mxu0 0
    %262 = vmatprep.mubr.bf16.mxu0 0
    %263 = vmatmul.mubr.bf16.gmra.mrb[0].mxu0 %v156
    %v264 = vpop.f32.mrb[0].mxu0
    %v265 = vadd.f32 %v180, %v264
    %v266 = vpop.f32.mrb[0].mxu0
    %v267 = vpop.f32.mrb[0].mxu0
    %v268 = vpop.f32.mrb[0].mxu0
    %269 = vdwg.mxu0
    %v270 = vpack.c.bf16 %v265, %v265
    %s271 = scalar_lea.vmem [#allocation5], 128
    %v272 = vld [vmem:[%s271] sm:$0xf]
    %v273 = vld [vmem:[%s271 + $0x4] sm:$0xf]
    %v274 = vld [vmem:[%s271 + $0x8] sm:$0xf]
    %v275 = vld [vmem:[%s271 + $0xc] sm:$0xf]
    %v276 = vld [vmem:[%s271 + $0x10] sm:$0xf]
    %v277 = vld [vmem:[%s271 + $0x14] sm:$0xf]
    %v278 = vld [vmem:[%s271 + $0x18] sm:$0xf]
    %v279 = vld [vmem:[%s271 + $0x1c] sm:$0xf]
    %v280 = vld [vmem:[%s271 + $0x20] sm:$0xf]
    %v281 = vld [vmem:[%s271 + $0x24] sm:$0xf]
    %v282 = vld [vmem:[%s271 + $0x28] sm:$0xf]
    %v283 = vld [vmem:[%s271 + $0x2c] sm:$0xf]
    %v284 = vld [vmem:[%s271 + $0x30] sm:$0xf]
    %v285 = vld [vmem:[%s271 + $0x34] sm:$0xf]
    %v286 = vld [vmem:[%s271 + $0x38] sm:$0xf]
    %v287 = vld [vmem:[%s271 + $0x3c] sm:$0xf]
    %s288 = scalar_lea.vmem %s2, 2
    %v289 = vld [vmem:[%s288] sm:$0x1]
    %v291 = vlaneseq
    %v292 = vshrl.u32 %v291, 7
    %v293 = vsub.s32 0, %v292
    %v294 = vrot.slane %v289, %v293
    %v312 = vunpack.c.l.b16 %v272
    %v313 = vunpack.c.l.b16 %v273
    %v314 = vunpack.c.l.b16 %v274
    %v315 = vunpack.c.l.b16 %v275
    %v316 = vunpack.c.l.b16 %v276
    %v317 = vunpack.c.l.b16 %v277
    %v318 = vunpack.c.l.b16 %v278
    %v319 = vunpack.c.l.b16 %v279
    %v320 = vunpack.c.l.b16 %v280
    %v321 = vunpack.c.l.b16 %v281
    %v322 = vunpack.c.l.b16 %v282
    %v323 = vunpack.c.l.b16 %v283
    %v324 = vunpack.c.l.b16 %v284
    %v325 = vunpack.c.l.b16 %v285
    %v326 = vunpack.c.l.b16 %v286
    %v327 = vunpack.c.l.b16 %v287
    %v328 = vpack.c.b16 %v313, %v312
    %v329 = vpack.c.b16 %v315, %v314
    %v330 = vpack.c.b16 %v317, %v316
    %v331 = vpack.c.b16 %v319, %v318
    %v332 = vpack.c.b16 %v321, %v320
    %v333 = vpack.c.b16 %v323, %v322
    %v334 = vpack.c.b16 %v325, %v324
    %v335 = vpack.c.b16 %v327, %v326
    %344 = vmatprep.subr.bf16.mxu0 0
    %345 = vmatpush1.bf16.msra.mxu0 %v328
    %346 = vmatprep.subr.bf16.mxu0 0
    %347 = vmatpush1.bf16.msra.mxu0 %v329
    %348 = vmatprep.subr.bf16.mxu0 0
    %349 = vmatpush1.bf16.msra.mxu0 %v330
    %350 = vmatprep.subr.bf16.mxu0 0
    %351 = vmatpush1.bf16.msra.mxu0 %v331
    %352 = vmatprep.subr.bf16.mxu0 0
    %353 = vmatpush1.bf16.msra.mxu0 %v332
    %354 = vmatprep.subr.bf16.mxu0 0
    %355 = vmatpush1.bf16.msra.mxu0 %v333
    %356 = vmatprep.subr.bf16.mxu0 0
    %357 = vmatpush1.bf16.msra.mxu0 %v334
    %358 = vmatprep.subr.bf16.mxu0 0
    %359 = vmatpush1.bf16.msra.mxu0 %v335
    %360 = vmatprep.subr.bf16.mxu0 0
    %361 = vmatpush1.bf16.msra.mxu0 0
    %362 = vmatprep.subr.bf16.mxu0 0
    %363 = vmatpush1.bf16.msra.mxu0 0
    %364 = vmatprep.subr.bf16.mxu0 0
    %365 = vmatpush1.bf16.msra.mxu0 0
    %366 = vmatprep.subr.bf16.mxu0 0
    %367 = vmatpush1.bf16.msra.mxu0 0
    %368 = vmatprep.subr.bf16.mxu0 0
    %369 = vmatpush1.bf16.msra.mxu0 0
    %370 = vmatprep.subr.bf16.mxu0 0
    %371 = vmatpush1.bf16.msra.mxu0 0
    %372 = vmatprep.subr.bf16.mxu0 0
    %373 = vmatpush1.bf16.msra.mxu0 0
    %374 = vmatprep.subr.bf16.mxu0 0
    %375 = vmatpush1.bf16.msra.mxu0 0
    %376 = vmatprep.mubr.bf16.mxu0 0
    %377 = vmatmul.mubr.bf16.gmra.mrb[0].mxu0 %v270
    %v378 = vpop.f32.mrb[0].mxu0
    %v379 = vadd.f32 %v294, %v378
    %v380 = vpop.f32.mrb[0].mxu0
    %v381 = vpop.f32.mrb[0].mxu0
    %v382 = vpop.f32.mrb[0].mxu0
    %383 = vdwg.mxu0
    %v384 = vmax.f32 %v379, 0.0
    %v385 = vpack.c.bf16 %v384, %v384
    %s386 = scalar_lea.vmem [#allocation5], 192
    %v387 = vld [vmem:[%s386] sm:$0xf]
    %v388 = vld [vmem:[%s386 + $0x4] sm:$0xf]
    %v389 = vld [vmem:[%s386 + $0x8] sm:$0xf]
    %v390 = vld [vmem:[%s386 + $0xc] sm:$0xf]
    %v391 = vld [vmem:[%s386 + $0x10] sm:$0xf]
    %v392 = vld [vmem:[%s386 + $0x14] sm:$0xf]
    %v393 = vld [vmem:[%s386 + $0x18] sm:$0xf]
    %v394 = vld [vmem:[%s386 + $0x1c] sm:$0xf]
    %v395 = vld [vmem:[%s386 + $0x20] sm:$0xf]
    %v396 = vld [vmem:[%s386 + $0x24] sm:$0xf]
    %v397 = vld [vmem:[%s386 + $0x28] sm:$0xf]
    %v398 = vld [vmem:[%s386 + $0x2c] sm:$0xf]
    %v399 = vld [vmem:[%s386 + $0x30] sm:$0xf]
    %v400 = vld [vmem:[%s386 + $0x34] sm:$0xf]
    %v401 = vld [vmem:[%s386 + $0x38] sm:$0xf]
    %v402 = vld [vmem:[%s386 + $0x3c] sm:$0xf]
    %s403 = scalar_lea.vmem %s2, 3
    %v404 = vld [vmem:[%s403] sm:$0x1]
    %v406 = vlaneseq
    %v407 = vshrl.u32 %v406, 7
    %v408 = vsub.s32 0, %v407
    %v409 = vrot.slane %v404, %v408
    %v427 = vunpack.c.l.b16 %v387
    %v428 = vunpack.c.l.b16 %v388
    %v429 = vunpack.c.l.b16 %v389
    %v430 = vunpack.c.l.b16 %v390
    %v431 = vunpack.c.l.b16 %v391
    %v432 = vunpack.c.l.b16 %v392
    %v433 = vunpack.c.l.b16 %v393
    %v434 = vunpack.c.l.b16 %v394
    %v435 = vunpack.c.l.b16 %v395
    %v436 = vunpack.c.l.b16 %v396
    %v437 = vunpack.c.l.b16 %v397
    %v438 = vunpack.c.l.b16 %v398
    %v439 = vunpack.c.l.b16 %v399
    %v440 = vunpack.c.l.b16 %v400
    %v441 = vunpack.c.l.b16 %v401
    %v442 = vunpack.c.l.b16 %v402
    %v443 = vpack.c.b16 %v428, %v427
    %v444 = vpack.c.b16 %v430, %v429
    %v445 = vpack.c.b16 %v432, %v431
    %v446 = vpack.c.b16 %v434, %v433
    %v447 = vpack.c.b16 %v436, %v435
    %v448 = vpack.c.b16 %v438, %v437
    %v449 = vpack.c.b16 %v440, %v439
    %v450 = vpack.c.b16 %v442, %v441
    %459 = vmatprep.subr.bf16.mxu0 0
    %460 = vmatpush1.bf16.msra.mxu0 %v443
    %461 = vmatprep.subr.bf16.mxu0 0
    %462 = vmatpush1.bf16.msra.mxu0 %v444
    %463 = vmatprep.subr.bf16.mxu0 0
    %464 = vmatpush1.bf16.msra.mxu0 %v445
    %465 = vmatprep.subr.bf16.mxu0 0
    %466 = vmatpush1.bf16.msra.mxu0 %v446
    %467 = vmatprep.subr.bf16.mxu0 0
    %468 = vmatpush1.bf16.msra.mxu0 %v447
    %469 = vmatprep.subr.bf16.mxu0 0
    %470 = vmatpush1.bf16.msra.mxu0 %v448
    %471 = vmatprep.subr.bf16.mxu0 0
    %472 = vmatpush1.bf16.msra.mxu0 %v449
    %473 = vmatprep.subr.bf16.mxu0 0
    %474 = vmatpush1.bf16.msra.mxu0 %v450
    %475 = vmatprep.subr.bf16.mxu0 0
    %476 = vmatpush1.bf16.msra.mxu0 0
    %477 = vmatprep.subr.bf16.mxu0 0
    %478 = vmatpush1.bf16.msra.mxu0 0
    %479 = vmatprep.subr.bf16.mxu0 0
    %480 = vmatpush1.bf16.msra.mxu0 0
    %481 = vmatprep.subr.bf16.mxu0 0
    %482 = vmatpush1.bf16.msra.mxu0 0
    %483 = vmatprep.subr.bf16.mxu0 0
    %484 = vmatpush1.bf16.msra.mxu0 0
    %485 = vmatprep.subr.bf16.mxu0 0
    %486 = vmatpush1.bf16.msra.mxu0 0
    %487 = vmatprep.subr.bf16.mxu0 0
    %488 = vmatpush1.bf16.msra.mxu0 0
    %489 = vmatprep.subr.bf16.mxu0 0
    %490 = vmatpush1.bf16.msra.mxu0 0
    %491 = vmatprep.mubr.bf16.mxu0 0
    %492 = vmatmul.mubr.bf16.gmra.mrb[0].mxu0 %v385
    %v493 = vpop.f32.mrb[0].mxu0
    %v494 = vadd.f32 %v409, %v493
    %v495 = vpop.f32.mrb[0].mxu0
    %v496 = vpop.f32.mrb[0].mxu0
    %v497 = vpop.f32.mrb[0].mxu0
    %498 = vdwg.mxu0
    %499 = vst [vmem:[#allocation7] sm:$0xff] %v494
    // Predicated region
    $region22: #{test_network_forward.1} parent=1 // pred_check
      _
    $region23: #{test_network_forward.1} parent=1 // pred_check_branch
      %501 = sbr.rel (0) target = $region25
    $region24: #{test_network_forward.1} parent=1 // pred_region
      %s503 = ssub.s32 128, 128
      %504 = vsyncadd [#allocation4], %s503
      %s506 = sshll.u32 [#allocation7], 4
      %s507 = int_to_ptr.vmem [resolvable:$true] %s506
      %509 = dma.vmem_to_hbm [thread:$0]  %s507, 128, %s3, [#allocation4]
    $region25: #{test_network_forward.1} parent=1 // pred_fallthru
      _
    // Predicated region
    $region26: #{test_network_forward.1} parent=1 // pred_check
      _
    $region27: #{test_network_forward.1} parent=1 // pred_check_branch
      %511 = sbr.rel (0) target = $region29
    $region28: #{test_network_forward.1} parent=1 // pred_region
      %512 = dma.done [#allocation4], 128
    $region29: #{test_network_forward.1} parent=1 // pred_fallthru
      _
    %513 = vsyncpa [#allocation3], 1
    %514 = vsyncpa [#allocation6], 1
    %515 = vsyncpa [#allocation4], 1

</llo_original>
